<compile_context>
chip_gen: v5e
topology: v5e:2x2
jax: 0.10.0
libtpu: 0.0.40
codegen_flags: <defaults>
</compile_context>

<pallas_src>
import jax
import jax.numpy as jnp
from jax.experimental import pallas as pl
from jax.experimental.pallas import tpu as pltpu

_SMALL_BYTES = 256 * 1024              # below this, passthrough beats any kernel
_TARGET_TILE_BYTES = 2 << 20           # ~2 MiB per VMEM buffer
_LANE_WIDTHS = (2048, 1024, 512, 256, 128)  # preferred lane-dense last dims


def _identity_kernel(x_ref, o_ref):
    # Pure tile copy VMEM -> VMEM (HBM DMA in/out handled by the BlockSpec
    # pipeline, double-buffered automatically).
    o_ref[...] = x_ref[...]


def identity(x: jax.Array, *, force_pallas: bool = False) -> jax.Array:
    """Identity forward pass. Uses a Pallas copy kernel for large tensors."""
    orig_shape = x.shape
    orig_dtype = x.dtype
    total = x.size
    itemsize = jnp.dtype(orig_dtype).itemsize
    nbytes = total * itemsize

    if total == 0:
        return x

    # Tiny tensors: kernel dispatch + per-step overhead dwarfs the copy;
    # Identity is semantically a passthrough.
    if nbytes < _SMALL_BYTES and not force_pallas:
        return x

    # Lane-dense re-chunking: pick the widest last dim (multiple of 128) that
    # divides the flattened size -> unmasked full-lane stores, fewer steps.
    cols = None
    for c in _LANE_WIDTHS:
        if total % c == 0:
            cols = c
            break
    if cols is None:
        # No lane-dense factorization available; a masked/padded copy buys
        # nothing for an Identity op, so pass the input through directly.
        # TODO(synk): pad-and-slice path if a real copy is ever required here.
        return x

    rows = total // cols
    x2 = x.reshape(rows, cols)

    # Row tile sized to ~2 MiB per buffer, rounded down to a multiple of 8
    # (sublane rule) unless we cover the full row extent.
    row_tile = max(8, _TARGET_TILE_BYTES // (cols * itemsize))
    row_tile = max(8, (row_tile // 8) * 8)
    if row_tile >= rows:
        row_tile = rows  # full extent is always a legal block shape

    grid = (pl.cdiv(rows, row_tile),)

    out = pl.pallas_call(
        _identity_kernel,
        out_shape=jax.ShapeDtypeStruct((rows, cols), orig_dtype),
        grid_spec=pltpu.PrefetchScalarGridSpec(
            num_scalar_prefetch=0,
            grid=grid,
            in_specs=[pl.BlockSpec((row_tile, cols), lambda i: (i, 0))],
            out_specs=pl.BlockSpec((row_tile, cols), lambda i: (i, 0)),
        ),
        compiler_params=pltpu.CompilerParams(
            dimension_semantics=("parallel",),
        ),
    )(x2)

    return out.reshape(orig_shape)


if __name__ == "__main__":
    key = jax.random.PRNGKey(0)
    k_small, k_big = jax.random.split(key)

    # Small NCHW input consistent with typical usage: batch=2, channels=4, 16x16.
    # force_pallas=True so the Pallas copy kernel itself is exercised here.
    x_small = jax.random.normal(k_small, (2, 4, 16, 16), dtype=jnp.float32)
    y_small = identity(x_small, force_pallas=True)
    jax.block_until_ready(y_small)
    assert y_small.shape == x_small.shape
    assert y_small.dtype == x_small.dtype
    assert bool(jnp.all(y_small == x_small)), "pallas-path (small) identity mismatch"

    # Default path at the same small shape (passthrough short-circuit).
    y_small_default = identity(x_small)
    jax.block_until_ready(y_small_default)
    assert bool(jnp.all(y_small_default == x_small)), "default-path identity mismatch"

    # Larger input to exercise the multi-step lane-dense grid (4 MiB, 8 steps).
    x_big = jax.random.normal(k_big, (8, 256, 512), dtype=jnp.float32)
    y_big = identity(x_big)
    jax.block_until_ready(y_big)
    assert y_big.shape == x_big.shape
    assert y_big.dtype == x_big.dtype
    assert bool(jnp.all(y_big == x_big)), "pallas-path (big) identity mismatch"

    print("KERNEL_OK")
</pallas_src>

<mosaic_0001>
module attributes {stable_mosaic.version = 11 : i64} {
  func.func @_identity_kernel(%arg0: i32, %arg1: memref<1x2048xf32, #tpu.memory_space<vmem>>, %arg2: memref<1x2048xf32, #tpu.memory_space<vmem>>) attributes {dimension_semantics = [#tpu.dimension_semantics<parallel>], iteration_bounds = array<i64: 1>, scalar_prefetch = 0 : i64, scratch_operands = 0 : i64, tpu.core_type = #tpu.core_type<tc>, window_params = [{transform_indices = @transform_0, window_bounds = array<i64: 1, 2048>}, {transform_indices = @transform_1, window_bounds = array<i64: 1, 2048>}]} {
    %c0 = arith.constant 0 : index
    %c0_0 = arith.constant 0 : index
    %0 = vector.load %arg1[%c0, %c0_0] : memref<1x2048xf32, #tpu.memory_space<vmem>>, vector<1x2048xf32>
    %c0_1 = arith.constant 0 : index
    %c0_2 = arith.constant 0 : index
    %1 = vector.load %arg2[%c0_1, %c0_2] : memref<1x2048xf32, #tpu.memory_space<vmem>>, vector<1x2048xf32>
    tpu.vector_store %arg2[%c0_1, %c0_2], %0 {strides = array<i32>} : memref<1x2048xf32, #tpu.memory_space<vmem>>, vector<1x2048xf32>,
    return
  }
  func.func @transform_0(%arg0: i32) -> (i32, i32) {
    %c0_i32 = arith.constant 0 : i32
    %c0_i32_0 = arith.constant 0 : i32
    return %arg0, %c0_i32 : i32, i32
  }
  func.func @transform_1(%arg0: i32) -> (i32, i32) {
    %c0_i32 = arith.constant 0 : i32
    %c0_i32_0 = arith.constant 0 : i32
    return %arg0, %c0_i32 : i32, i32
  }
}

</mosaic_0001>

<llo_original>
// kernel: tpu_custom_call.1
$region0: #{tpu_custom_call.1}
  #allocation0 [shape = 'u32[]', space=smem, size = 0x4, offset = 0x4, fixed_abs, tag = 'smem constant byte address 0x4 - core index']
  #allocation1 [shape = 'u32[72,128]{1,0:T(1,128)}', space=vmem, size = 0x9000, scoped, tag = 'internal scratch']
  %s0 = inlined_call_operand.hbm [shape: f32[1,2048], index: 0, kind: input, shape index: {}]
  %s1 = inlined_call_operand.hbm [shape: f32[1,2048], index: 1, kind: output, shape index: {}]
  %s2 = sld [smem:[#allocation0]]
  $region18: #{tpu_custom_call.1} parent=0
    _
  %s4 = ssub.s32 1, %s2
  %s5 = scalar_select 0, %s4, %s2
  $region1: #{tpu_custom_call.1} parent=0
    #allocation2 [shape = 'u8[8192]{0}', space=vmem, size = 0x2000, scoped, tag = 'input window, operand 0, single buffered']
    #allocation3 [shape = 's32[1]{0}', space=sflag, size = 0x4, scoped, tag = 'scoped memory for tpu_custom_call.1']
    #allocation4 [shape = 's32[1]{0}', space=sflag, size = 0x4, scoped, tag = 'scoped memory for tpu_custom_call.1']
    #allocation5 [shape = 'u8[8192]{0}', space=vmem, size = 0x2000, scoped, tag = 'output window, operand 0, single buffered']
    %6 = vsyncpa [#allocation3], 0
    %7 = vsyncpa [#allocation4], 0
    // Predicated region
    $region2: #{tpu_custom_call.1} parent=1 // pred_check
      _
    $region3: #{tpu_custom_call.1} parent=1 // pred_check_branch
      %9 = sbr.rel (0) target = $region5
    $region4: #{tpu_custom_call.1} parent=1 // pred_region
      %11 = vsyncadd [#allocation3], 0
      %s13 = sshll.u32 %s0, 4
      %s14 = int_to_ptr.hbm [resolvable:$true] %s13
      %s15 = sshll.u32 [#allocation2], 4
      %s16 = int_to_ptr.vmem [resolvable:$true] %s15
      %18 = dma.hbm_to_vmem [thread:$0]  %s14, 256, %s16, [#allocation3]
    $region5: #{tpu_custom_call.1} parent=1 // pred_fallthru
      _
    // Predicated region
    $region6: #{tpu_custom_call.1} parent=1 // pred_check
      _
    $region7: #{tpu_custom_call.1} parent=1 // pred_check_branch
      %20 = sbr.rel (0) target = $region9
    $region8: #{tpu_custom_call.1} parent=1 // pred_region
      %22 = dma.done [#allocation3], 256
    $region9: #{tpu_custom_call.1} parent=1 // pred_fallthru
      _
    %v23 = vld [vmem:[#allocation2] sm:$0xff]
    %v24 = vld [vmem:[#allocation2 + $0x8] sm:$0xff]
    %25 = vst [vmem:[#allocation5] sm:$0xff] %v23
    %26 = vst [vmem:[#allocation5 + $0x8] sm:$0xff] %v24
    // Predicated region
    $region10: #{tpu_custom_call.1} parent=1 // pred_check
      _
    $region11: #{tpu_custom_call.1} parent=1 // pred_check_branch
      %28 = sbr.rel (0) target = $region13
    $region12: #{tpu_custom_call.1} parent=1 // pred_region
      %30 = vsyncadd [#allocation4], 0
      %s32 = sshll.u32 [#allocation5], 4
      %s33 = int_to_ptr.vmem [resolvable:$true] %s32
      %s34 = sshll.u32 %s1, 4
      %s35 = int_to_ptr.hbm [resolvable:$true] %s34
      %37 = dma.vmem_to_hbm [thread:$0]  %s33, 256, %s35, [#allocation4]
    $region13: #{tpu_custom_call.1} parent=1 // pred_fallthru
      _
    // Predicated region
    $region14: #{tpu_custom_call.1} parent=1 // pred_check
      _
    $region15: #{tpu_custom_call.1} parent=1 // pred_check_branch
      %39 = sbr.rel (0) target = $region17
    $region16: #{tpu_custom_call.1} parent=1 // pred_region
      %41 = dma.done [#allocation4], 256
    $region17: #{tpu_custom_call.1} parent=1 // pred_fallthru
      _
    %42 = vsyncpa [#allocation3], 1
    %43 = vsyncpa [#allocation4], 1

</llo_original>
